<compile_context>
chip_gen: v7x
topology: tpu7x:2x2x1
jax: 0.10.0
libtpu: 0.0.40
codegen_flags: <defaults>
</compile_context>

<pallas_src>
import functools

import numpy as np
import jax
import jax.numpy as jnp
from jax import lax
from jax.experimental import pallas as pl
from jax.experimental.pallas import tpu as pltpu

EPS = 1e-5
NODES = 4
IN_INDEX = [list(range(2 + n)) for n in range(NODES)]          # default DARTS cell
NUM_EDGES = sum(len(ii) for ii in IN_INDEX)                    # 14
NUM_SRC_STATES = NODES + 1                                     # states 0..4 are read
TAPS = [(dh, dw) for dh in (-1, 0, 1) for dw in (-1, 0, 1)]    # 3x3 conv taps

# Static topology, state-major: for each source state the (target node, edge id)
# pairs reading it.  Edge ids follow the module's creation order.
_EDGES = []
_eid = 0
for _node, _in_idx in enumerate(IN_INDEX):
    for _j in _in_idx:
        _EDGES.append((_node, _j, _eid))
        _eid += 1
STATE_EDGES = [[(n, e) for (n, j, e) in _EDGES if j == s]
               for s in range(NUM_SRC_STATES)]
EDGE_ORDER = [e for s in range(NUM_SRC_STATES) for (_, e) in STATE_EDGES[s]]

VMEM = pltpu.MemorySpace.VMEM
SMEM = pltpu.MemorySpace.SMEM


# --------------------------------------------------------------------------- #
# Backend probes (run once, concrete Python bools -> static kernel config)
# --------------------------------------------------------------------------- #
@functools.lru_cache(maxsize=1)
def _roll_matches_jnp():
    """pltpu.roll direction guard: probed once so spatial shifts are exact."""
    def k(x_ref, o_ref):
        o_ref[...] = pltpu.roll(x_ref[...], 1, axis=1)

    x = jnp.broadcast_to(jnp.arange(128, dtype=jnp.float32)[None, :], (8, 128))
    y = pl.pallas_call(
        k,
        out_shape=jax.ShapeDtypeStruct((8, 128), jnp.float32),
        in_specs=[pl.BlockSpec(memory_space=VMEM)],
        out_specs=pl.BlockSpec(memory_space=VMEM),
    )(x)
    # jnp.roll convention: out[i] = in[i - 1]  ->  out[0, 1] == 0
    return bool(float(y[0, 1]) < 0.5)


@functools.lru_cache(maxsize=1)
def _strided_store_ok():
    """Does `ref[pl.ds(start, size, stride=2), :] = v` interleave rows correctly?"""
    def k(a_ref, b_ref, o_ref):
        o_ref[...] = jnp.zeros_like(o_ref)
        o_ref[pl.ds(0, 4, stride=2), :] = a_ref[...]
        o_ref[pl.ds(1, 4, stride=2), :] = b_ref[...]

    rows = (jnp.arange(8, dtype=jnp.float32)[:, None]
            * jnp.ones((1, 128), jnp.float32))
    a, b = rows[0::2], rows[1::2]
    try:
        y = pl.pallas_call(
            k,
            out_shape=jax.ShapeDtypeStruct((8, 128), jnp.float32),
            in_specs=[pl.BlockSpec(memory_space=VMEM)] * 2,
            out_specs=pl.BlockSpec(memory_space=VMEM),
        )(a, b)
        return bool(np.allclose(np.asarray(y), np.asarray(rows)))
    except Exception:
        return False          # fall back to per-row stores


def _tap_masks(N, H, W):
    """(9, M) validity masks for the 3x3 taps of a zero-padded conv."""
    M = N * H * W
    m = np.arange(M)
    w = m % W
    h = (m // W) % H
    masks = np.zeros((len(TAPS), M), np.float32)
    for t, (dh, dw) in enumerate(TAPS):
        masks[t] = ((h + dh >= 0) & (h + dh < H) & (w + dw >= 0) & (w + dw < W))
    return jnp.asarray(masks)


# --------------------------------------------------------------------------- #
# Fused Cell kernel (preprocess0/1 + 14 MixedOp edges + 4 node aggregations)
# --------------------------------------------------------------------------- #
def _make_cell_kernel(N, H, W, C_curr, roll_is_jnp, use_strided_store):
    C_half = C_curr // 2
    M = N * H * W
    n_taps = len(TAPS)

    # state-major row offsets into the stacked conv-weight / wb-column arrays
    row_off, off = [], 0
    for s in range(NUM_SRC_STATES):
        row_off.append(off)
        off += len(STATE_EDGES[s]) * C_half

    def rshift(x, offpix):
        # y[:, m] = x[:, (m + offpix) mod M]; wrap-around lanes are always
        # zeroed by the tap masks, so the rotation is exact for valid pixels.
        if offpix == 0:
            return x
        shift = (-offpix) % M if roll_is_jnp else offpix % M
        return pltpu.roll(x, shift, axis=1)

    def bn_rows(y, scale_col=None):
        # BatchNorm2d(affine=False), training batch stats, two-pass variance.
        mean = jnp.mean(y, axis=1, keepdims=True)
        cent = y - mean
        var = jnp.mean(cent * cent, axis=1, keepdims=True)
        s = lax.rsqrt(var + EPS)
        if scale_col is not None:
            s = s * scale_col                     # fold w2*w1[:,1] into BN scale
        return cent * s

    def kernel(x0_ref, x1_ref, p0_ref, p1_ref, cw_ref, mask_ref, wb_ref,
               wa_ref, w2_ref, o_ref, pre_ref, acc_ref, tap_ref):
        # ---- preprocess0 / preprocess1: ReLU -> 1x1 conv -> BN --------------
        for slot, (x_ref, p_ref) in enumerate(((x0_ref, p0_ref), (x1_ref, p1_ref))):
            x = jnp.maximum(x_ref[...], 0.0).astype(jnp.bfloat16)
            y = jnp.dot(p_ref[...], x, preferred_element_type=jnp.float32)
            pre_ref[pl.ds(slot * C_curr, C_curr), :] = bn_rows(y)

        # tap masks broadcast to C_half sublanes exactly once (reused by all
        # states; JAX does not CSE broadcast_in_dim, so keep this hoisted).
        masks = [jnp.broadcast_to(mask_ref[pl.ds(t, 1), :], (C_half, M))
                 for t in range(n_taps)]

        def state_rows(j, row, nrows):
            # channels-first (C, M) view of state j (VMEM resident)
            if j < 2:
                return pre_ref[pl.ds(j * C_curr + row, nrows), :]
            return o_ref[pl.ds((j - 2) * C_curr + row, nrows), :]

        started = set()    # nodes whose accumulator has been written once

        for s in range(NUM_SRC_STATES):
            edges = STATE_EDGES[s]
            rows = len(edges) * C_half

            xt = state_rows(s, 0, C_half)            # MixedOp input half
            xt2 = state_rows(s, C_half, C_half)      # pass-through half
            xr = jnp.maximum(xt, 0.0)                # conv taps use xtemp only

            # (9*C_half, M) shifted+masked bf16 tap stack, built once per state
            for t, (dh, dw) in enumerate(TAPS):
                tap_ref[pl.ds(t * C_half, C_half), :] = (
                    rshift(xr, dh * W + dw) * masks[t]).astype(jnp.bfloat16)

            # One stacked MXU matmul for ALL edges reading this state:
            #   (n_edges*C_half, 9*C_half) @ (9*C_half, M), f32 accumulation.
            y = jnp.dot(cw_ref[pl.ds(row_off[s], rows), :], tap_ref[...],
                        preferred_element_type=jnp.float32)
            # Per-row (= per edge, per channel) BN with wb folded into the scale.
            ybn = bn_rows(y, wb_ref[pl.ds(row_off[s], rows), :])

            # scatter into the per-node accumulators
            for k_idx, (node, e) in enumerate(edges):
                ca = wa_ref[e] * xt + ybn[k_idx * C_half:(k_idx + 1) * C_half, :]
                cb = w2_ref[e] * xt2
                a_sl = pl.ds(node * C_curr, C_half)
                b_sl = pl.ds(node * C_curr + C_half, C_half)
                if node in started:
                    acc_ref[a_sl, :] += ca
                    acc_ref[b_sl, :] += cb
                else:                                 # first edge: write, no add
                    acc_ref[a_sl, :] = ca
                    acc_ref[b_sl, :] = cb
                    started.add(node)

            # Node s-1 has now received all of its inputs: emit its output.
            # cat([temp1, xtemp2]) + channel_shuffle(groups=2) == row interleave.
            done = s - 1
            if 0 <= done < NODES:
                base = done * C_curr
                a = acc_ref[pl.ds(base, C_half), :]
                b = acc_ref[pl.ds(base + C_half, C_half), :]
                if use_strided_store:
                    # two strided block stores instead of 2*C_half row stores
                    o_ref[pl.ds(base, C_half, stride=2), :] = a
                    o_ref[pl.ds(base + 1, C_half, stride=2), :] = b
                else:
                    for c in range(C_half):
                        o_ref[pl.ds(base + 2 * c, 1), :] = a[c:c + 1, :]
                        o_ref[pl.ds(base + 2 * c + 1, 1), :] = b[c:c + 1, :]

    return kernel


# --------------------------------------------------------------------------- #
# Wrapper
# --------------------------------------------------------------------------- #
def cell_forward(params, s0_nchw, s1_nchw, weights1, weights2):
    roll_is_jnp = _roll_matches_jnp()        # probed once, concrete Python bools
    use_strided = _strided_store_ok()
    return _cell_forward(params, s0_nchw, s1_nchw, weights1, weights2,
                         roll_is_jnp, use_strided)


@functools.partial(jax.jit, static_argnums=(5, 6))
def _cell_forward(params, s0, s1, weights1, weights2, roll_is_jnp, use_strided):
    N, C_pp, H, W = s0.shape
    C_p = s1.shape[1]
    C_curr = params["pre0_w"].shape[0]
    C_half = C_curr // 2
    M = N * H * W

    # NCHW -> channels-first (C, N*H*W): channels on sublanes, pixels on lanes.
    x0 = jnp.transpose(s0, (1, 0, 2, 3)).reshape(C_pp, M)
    x1 = jnp.transpose(s1, (1, 0, 2, 3)).reshape(C_p, M)
    masks = _tap_masks(N, H, W)

    # Pre-folded architecture scalars (tiny (14,) arrays -> negligible wrapper cost)
    w1 = weights1.astype(jnp.float32)
    w2 = weights2.astype(jnp.float32)
    wa = w2 * w1[:, 0]                         # skip_connect branch
    wb = w2 * w1[:, 1]                         # conv branch, folded into BN scale
    edge_order = jnp.asarray(EDGE_ORDER, dtype=jnp.int32)
    wb_col = jnp.repeat(wb[edge_order], C_half)[:, None]    # state-major per-row

    # VMEM budget from the actual working set; cap at 64 MiB (v7x physical).
    f32b, bf16b = 4, 2
    need = ((x0.size + x1.size + masks.size + wb_col.size) * f32b
            + (params["pre0_w"].size + params["pre1_w"].size
               + params["conv_w"].size) * bf16b
            + (NODES * C_curr * M) * f32b * 2          # output + accumulators
            + (2 * C_curr * M) * f32b                  # preprocessed states
            + (9 * C_half * M) * bf16b)                # tap stack
    vmem_limit = int(min(64 * 2**20, max(16 * 2**20, 2 * need)))

    outT = pl.pallas_call(
        _make_cell_kernel(N, H, W, C_curr, roll_is_jnp, use_strided),
        out_shape=jax.ShapeDtypeStruct((NODES * C_curr, M), jnp.float32),
        in_specs=[pl.BlockSpec(memory_space=VMEM)] * 7
        + [pl.BlockSpec(memory_space=SMEM)] * 2,
        out_specs=pl.BlockSpec(memory_space=VMEM),
        scratch_shapes=[pltpu.VMEM((2 * C_curr, M), jnp.float32),       # states 0/1
                        pltpu.VMEM((NODES * C_curr, M), jnp.float32),   # node accs
                        pltpu.VMEM((9 * C_half, M), jnp.bfloat16)],     # tap stack
        compiler_params=pltpu.CompilerParams(vmem_limit_bytes=vmem_limit),
    )(x0, x1, params["pre0_w"], params["pre1_w"], params["conv_w"], masks,
      wb_col, wa, w2)

    # (4*C, M) -> NCHW
    return jnp.transpose(outT.reshape(NODES * C_curr, N, H, W), (1, 0, 2, 3))


def pack_params(pre0_oihw, pre1_oihw, edge_w_oihw):
    """Kernel-side weight layout (bf16 MXU operands).

    pre*_w : (C_curr, C_in)                      -- y = W @ relu(x)
    conv_w : (NUM_EDGES*C_half, 9*C_half)        -- state-major edge order,
             K index = tap*C_half + in_channel (matches the tap stack rows).
    """
    E, O, I, KH, KW = edge_w_oihw.shape
    cw = jnp.transpose(edge_w_oihw, (0, 1, 3, 4, 2)).reshape(E, O, KH * KW * I)
    cw = cw[jnp.asarray(EDGE_ORDER, dtype=jnp.int32)].reshape(E * O, KH * KW * I)
    return {
        "pre0_w": pre0_oihw[:, :, 0, 0].astype(jnp.bfloat16),
        "pre1_w": pre1_oihw[:, :, 0, 0].astype(jnp.bfloat16),
        "conv_w": cw.astype(jnp.bfloat16),
    }


# --------------------------------------------------------------------------- #
# Pure-JAX reference (correctness check)
# --------------------------------------------------------------------------- #
def ref_cell_forward(pre0_oihw, pre1_oihw, edge_w_oihw, s0, s1, weights1, weights2):
    C_curr = pre0_oihw.shape[0]
    C_half = C_curr // 2
    perm = np.array([(j % 2) * C_half + j // 2 for j in range(C_curr)])

    def bn(y, axes):
        mean = jnp.mean(y, axis=axes, keepdims=True)
        var = jnp.mean((y - mean) ** 2, axis=axes, keepdims=True)
        return (y - mean) * lax.rsqrt(var + EPS)

    def pre(x_nchw, w_oihw):
        x = jnp.transpose(x_nchw, (0, 2, 3, 1))
        y = jnp.einsum("nhwc,oc->nhwo", jnp.maximum(x, 0.0), w_oihw[:, :, 0, 0],
                       precision=lax.Precision.HIGHEST)
        return bn(y, (0, 1, 2))

    def edge(x_nhwc, w_oihw, wops):
        y = lax.conv_general_dilated(
            jnp.maximum(x_nhwc, 0.0), jnp.transpose(w_oihw, (2, 3, 1, 0)),
            window_strides=(1, 1), padding=((1, 1), (1, 1)),
            dimension_numbers=("NHWC", "HWIO", "NHWC"),
            precision=lax.Precision.HIGHEST)
        return wops[0] * x_nhwc + wops[1] * bn(y, (0, 1, 2))

    states = [pre(s0, pre0_oihw), pre(s1, pre1_oihw)]
    edge_id = 0
    for in_idx in IN_INDEX:
        s = 0.0
        for j in in_idx:
            h = states[j]
            xt, xt2 = h[..., :C_half], h[..., C_half:]
            t1 = edge(xt, edge_w_oihw[edge_id], weights1[edge_id])
            ans = jnp.concatenate([t1, xt2], axis=-1)[..., perm]
            s = s + weights2[edge_id] * ans
            edge_id += 1
        states.append(s)
    out = jnp.concatenate(states[2:], axis=-1)
    return jnp.transpose(out, (0, 3, 1, 2))


# --------------------------------------------------------------------------- #
if __name__ == "__main__":
    key = jax.random.PRNGKey(0)
    N, C_prev_prev, C_prev, C_curr, HW = 2, 8, 8, 8, 8
    C_half = C_curr // 2

    k = jax.random.split(key, 7)
    s0 = jax.random.normal(k[0], (N, C_prev_prev, HW, HW), jnp.float32)
    s1 = jax.random.normal(k[1], (N, C_prev, HW, HW), jnp.float32)

    # deterministic synthetic parameters (same shapes as the PyTorch module)
    pre0_oihw = 0.1 * jax.random.normal(k[2], (C_curr, C_prev_prev, 1, 1), jnp.float32)
    pre1_oihw = 0.1 * jax.random.normal(k[3], (C_curr, C_prev, 1, 1), jnp.float32)
    edge_w_oihw = 0.1 * jax.random.normal(
        k[4], (NUM_EDGES, C_half, C_half, 3, 3), jnp.float32)

    # architecture weights (positive, as implied by weights_full > 0)
    weights1 = jax.nn.softmax(jax.random.normal(k[5], (NUM_EDGES, 2)), axis=-1)
    weights2 = jax.random.uniform(k[6], (NUM_EDGES,), minval=0.1, maxval=1.0)

    params = pack_params(pre0_oihw, pre1_oihw, edge_w_oihw)

    out = jax.block_until_ready(cell_forward(params, s0, s1, weights1, weights2))
    assert out.shape == (N, NODES * C_curr, HW, HW), out.shape

    ref = jax.block_until_ready(
        ref_cell_forward(pre0_oihw, pre1_oihw, edge_w_oihw, s0, s1,
                         weights1, weights2))
    # Tolerance accounts for bf16 MXU operands in the kernel; structural bugs
    # would show up as O(1) mismatches.
    np.testing.assert_allclose(np.asarray(out), np.asarray(ref),
                               rtol=4e-2, atol=4e-2)

    print("KERNEL_OK")
</pallas_src>

<mosaic_0001>
module attributes {stable_mosaic.version = 11 : i64} {
  func.func @k(%arg0: memref<8x128xf32, #tpu.memory_space<vmem>>, %arg1: memref<8x128xf32, #tpu.memory_space<vmem>>) attributes {dimension_semantics = [], scalar_prefetch = 0 : i64, scratch_operands = 0 : i64, tpu.core_type = #tpu.core_type<tc>} {
    %c0 = arith.constant 0 : index
    %c0_0 = arith.constant 0 : index
    %0 = vector.load %arg0[%c0, %c0_0] : memref<8x128xf32, #tpu.memory_space<vmem>>, vector<8x128xf32>
    %c1_i32 = arith.constant 1 : i32
    %1 = tpu.dynamic_rotate %0 by %c1_i32 dim 1 : vector<8x128xf32>, i32 -> vector<8x128xf32>
    %c0_1 = arith.constant 0 : index
    %c0_2 = arith.constant 0 : index
    %2 = vector.load %arg1[%c0_1, %c0_2] : memref<8x128xf32, #tpu.memory_space<vmem>>, vector<8x128xf32>
    tpu.vector_store %arg1[%c0_1, %c0_2], %1 {strides = array<i32>} : memref<8x128xf32, #tpu.memory_space<vmem>>, vector<8x128xf32>,
    return
  }
}

</mosaic_0001>

<llo_original>
// kernel: tpu_custom_call.1
$region0: #{tpu_custom_call.1}
  #allocation0 [shape = 'u32[]', space=smem, size = 0x4, offset = 0x4, fixed_abs, tag = 'smem constant byte address 0x4 - core index']
  #allocation1 [shape = 'u32[144,128]{1,0:T(1,128)}', space=vmem, size = 0x12000, scoped, tag = 'internal scratch']
  %s0 = inlined_call_operand.hbm [shape: f32[8,128], index: 0, kind: input, shape index: {}]
  %s1 = inlined_call_operand.hbm [shape: f32[8,128], index: 1, kind: output, shape index: {}]
  %s2 = sld [smem:[#allocation0]]
  $region18: #{tpu_custom_call.1} parent=0
    _
  %s4 = ssub.s32 1, %s2
  %s5 = scalar_select 0, %s4, %s2
  $region1: #{tpu_custom_call.1} parent=0
    #allocation2 [shape = 'u8[4096]{0}', space=vmem, size = 0x1000, scoped, tag = 'input window, operand 0, single buffered']
    #allocation3 [shape = 's32[1]{0}', space=sflag, size = 0x4, scoped, tag = 'scoped memory for tpu_custom_call.1']
    #allocation4 [shape = 's32[1]{0}', space=sflag, size = 0x4, scoped, tag = 'scoped memory for tpu_custom_call.1']
    #allocation5 [shape = 'u8[4096]{0}', space=vmem, size = 0x1000, scoped, tag = 'output window, operand 0, single buffered']
    %6 = vsyncpa [#allocation3], 0
    %7 = vsyncpa [#allocation4], 0
    // Predicated region
    $region2: #{tpu_custom_call.1} parent=1 // pred_check
      _
    $region3: #{tpu_custom_call.1} parent=1 // pred_check_branch
      %9 = sbr.rel (0) target = $region5
    $region4: #{tpu_custom_call.1} parent=1 // pred_region
      %s11 = ssub.s32 128, 128
      %12 = vsyncadd [#allocation3], %s11
      %s14 = sshll.u32 [#allocation2], 4
      %s15 = int_to_ptr.vmem [resolvable:$true] %s14
      %17 = dma.hbm_to_vmem [thread:$0]  %s0, 128, %s15, [#allocation3]
    $region5: #{tpu_custom_call.1} parent=1 // pred_fallthru
      _
    // Predicated region
    $region6: #{tpu_custom_call.1} parent=1 // pred_check
      _
    $region7: #{tpu_custom_call.1} parent=1 // pred_check_branch
      %19 = sbr.rel (0) target = $region9
    $region8: #{tpu_custom_call.1} parent=1 // pred_region
      %20 = dma.done [#allocation3], 128
    $region9: #{tpu_custom_call.1} parent=1 // pred_fallthru
      _
    %v21 = vld [vmem:[#allocation2] sm:$0xff]
    %22 = vrot.lane.b32.xlu0 %v21, 1
    %v23 = vpop.permute.xlu0 %22
    %24 = vst [vmem:[#allocation5] sm:$0xff] %v23
    // Predicated region
    $region10: #{tpu_custom_call.1} parent=1 // pred_check
      _
    $region11: #{tpu_custom_call.1} parent=1 // pred_check_branch
      %26 = sbr.rel (0) target = $region13
    $region12: #{tpu_custom_call.1} parent=1 // pred_region
      %s28 = ssub.s32 128, 128
      %29 = vsyncadd [#allocation4], %s28
      %s31 = sshll.u32 [#allocation5], 4
      %s32 = int_to_ptr.vmem [resolvable:$true] %s31
      %34 = dma.vmem_to_hbm [thread:$0]  %s32, 128, %s1, [#allocation4]
    $region13: #{tpu_custom_call.1} parent=1 // pred_fallthru
      _
    // Predicated region
    $region14: #{tpu_custom_call.1} parent=1 // pred_check
      _
    $region15: #{tpu_custom_call.1} parent=1 // pred_check_branch
      %36 = sbr.rel (0) target = $region17
    $region16: #{tpu_custom_call.1} parent=1 // pred_region
      %37 = dma.done [#allocation4], 128
    $region17: #{tpu_custom_call.1} parent=1 // pred_fallthru
      _
    %38 = vsyncpa [#allocation3], 1
    %39 = vsyncpa [#allocation4], 1

</llo_original>
